<compile_context>
chip_gen: v6e
topology: v6e:2x2x1
jax: 0.10.0
libtpu: 0.0.40
codegen_flags: <defaults>
</compile_context>

<pallas_src>
import functools

import numpy as np
import jax
import jax.numpy as jnp
from jax import lax
from jax.experimental import pallas as pl
from jax.experimental.pallas import tpu as pltpu


def _round_up(x, m):
    return ((x + m - 1) // m) * m


# ---------------------------------------------------------------------------
# lookup table (kept for parity with the torch module; only the pure-JAX
# reference uses it -- the kernels rebuild the rows with VPU compares)
# ---------------------------------------------------------------------------
def make_lookup_table(num_classes: int) -> jnp.ndarray:
    C = num_classes
    t = np.zeros((C * C, C), dtype=np.float32)
    for i in range(C * C):
        t[i, i % C] = 1.0
        if i >= C:
            t[i, i // C] = 1.0
    t[-1] = 0.0
    return jnp.asarray(t)


# ---------------------------------------------------------------------------
# hardware / tiling helpers
# ---------------------------------------------------------------------------
def _num_tensorcores():
    """Best-effort TensorCores-per-chip (2 on v7x).  Fallback of 2 is harmless
    on single-core chips (it only adds one tiny extra accumulator)."""
    try:
        info = pltpu.get_tpu_info()
        for name in ("num_cores", "core_count", "num_tensorcores"):
            v = getattr(info, name, None)
            if isinstance(v, int) and v > 0:
                return max(1, min(2, int(v)))
    except Exception:
        pass
    try:
        kind = jax.devices()[0].device_kind.lower()
        if ("v5e" in kind or "v5 lite" in kind or "v6e" in kind
                or "v6 lite" in kind):
            return 1
    except Exception:
        pass
    return 2


def _vmem_limit_for(working_set_bytes):
    """Raise the scoped-VMEM limit only when the double-buffered working set
    needs it (small calls keep the conservative default; v7x-safe cap)."""
    if working_set_bytes <= (8 << 20):
        return None
    cap = 48 << 20
    try:
        cap = min(cap, int(pltpu.get_tpu_info().vmem_capacity_bytes * 3 // 4))
    except Exception:
        pass
    return int(min(cap, max(24 << 20, 2 * working_set_bytes)))


def _compiler_params(vmem_limit):
    sem = ("parallel", "arbitrary")
    if vmem_limit is None:
        return pltpu.CompilerParams(dimension_semantics=sem)
    return pltpu.CompilerParams(dimension_semantics=sem,
                                vmem_limit_bytes=int(vmem_limit))


def _plan_level(S, bytes_per_lane, ncores, max_tile=1024, block_budget=6 << 20):
    """Per-level lane tiling: the largest 128-multiple divisor of the padded
    spatial extent that fits the VMEM block budget, plus a core split."""
    S128 = _round_up(S, 128)
    cap_lanes = max(128, min(max_tile,
                             (block_budget // max(bytes_per_lane, 1)) // 128 * 128))
    m = S128 // 128
    best, d = 1, 1
    while d * d <= m:
        if m % d == 0:
            for q in (d, m // d):
                if q * 128 <= cap_lanes:
                    best = max(best, q)
        d += 1
    ts = best * 128
    ntiles = S128 // ts
    n_split = ncores if (ncores > 1 and ntiles >= ncores
                         and ntiles % ncores == 0) else 1
    return S128, ts, n_split, ntiles // n_split


# ---------------------------------------------------------------------------
# Pallas kernels
# ---------------------------------------------------------------------------
def _cls_sum_kernel_packed(idx_ref, x_ref, out_ref, *, num_classes,
                           num_anchor_rows, alpha, gamma):
    """Focal-loss sum, sublane-packed layout (C < 8).

    idx_ref: (G, ts)   int32 anchor labels (-2 = ignore, -1 = background).
    x_ref:   (G*C, ts) logits, rows ordered anchor-major / class-minor.
    out_ref: (1, 1, ts) f32 accumulator for this parallel split.
    """
    C = num_classes
    G = num_anchor_rows
    CC = C * C

    @pl.when(pl.program_id(1) == 0)
    def _init():
        out_ref[...] = jnp.zeros_like(out_ref)

    idx = idx_ref[...]
    valid = (idx != -2).astype(jnp.float32)                  # (G, ts)
    # torch negative indexing wraps: -1 -> CC-1 (all-zero row), -2 -> CC-2
    # (masked out afterwards by `valid` -- keep that ordering).
    iw = jnp.where(idx < 0, idx + CC, idx)
    # i // C and i % C via float math (safe: CC << 2^23, 0.5/C margin).
    iw_f = iw.astype(jnp.float32)
    idiv_f = jnp.floor((iw_f + 0.5) * (1.0 / C))
    idiv = idiv_f.astype(jnp.int32)
    imod = (iw_f - idiv_f * C).astype(jnp.int32)
    not_last = iw != (CC - 1)                                # last table row == 0
    # the (up to two) "on" classes of this anchor; -1 == none
    m1 = jnp.where(not_last, imod, -1)
    m2 = jnp.where(jnp.logical_and(not_last, iw >= C), idiv, -1)

    total = jnp.zeros(idx.shape, jnp.float32)
    for c in range(C):                                       # static unroll, C < 8
        # class-c rows: c, c+C, ...  (sublane-strided load, no 8-sublane padding)
        x_c = x_ref[pl.ds(c, G, stride=C), :].astype(jnp.float32)
        tf = jnp.logical_or(m1 == c, m2 == c).astype(jnp.float32)
        # focal_loss_legacy, softplus-fused.
        relu_x = jnp.maximum(x_c, 0.0)
        relu_nx = relu_x - x_c                               # relu(-x)
        sp = jnp.log1p(jnp.exp(-jnp.abs(x_c)))
        bce = relu_x - x_c * tf + sp
        modulator = jnp.exp(gamma * (tf * (-x_c) - (sp + relu_nx)))
        # where(t==1, a*l, (1-a)*l) == l * ((1-a) + (2a-1)*t) for t in {0,1}
        total = total + modulator * bce * ((1.0 - alpha) + (2.0 * alpha - 1.0) * tf)
    # NOTE: / num_positives_sum is hoisted out of the kernel (scalar, in JAX).
    out_ref[...] += jnp.sum(total * valid, axis=0, keepdims=True)[None]


def _cls_sum_kernel_3d(idx_ref, x_ref, out_ref, *, num_classes, alpha, gamma):
    """Focal-loss sum, general (C >= 8) layout: x (G, C, ts), idx (G, 1, ts)."""
    C = num_classes
    CC = C * C

    @pl.when(pl.program_id(1) == 0)
    def _init():
        out_ref[...] = jnp.zeros_like(out_ref)

    idx = idx_ref[...]
    x = x_ref[...].astype(jnp.float32)

    valid = (idx != -2)
    iw = jnp.where(idx < 0, idx + CC, idx)
    iw_f = iw.astype(jnp.float32)
    idiv_f = jnp.floor((iw_f + 0.5) * (1.0 / C))
    idiv = idiv_f.astype(jnp.int32)
    imod = (iw_f - idiv_f * C).astype(jnp.int32)

    c_iota = lax.broadcasted_iota(jnp.int32, x.shape, 1)
    t = (c_iota == imod) | ((iw >= C) & (c_iota == idiv))
    t = jnp.logical_and(t, iw != (CC - 1))
    tf = t.astype(jnp.float32)

    relu_x = jnp.maximum(x, 0.0)
    relu_nx = relu_x - x
    sp = jnp.log1p(jnp.exp(-jnp.abs(x)))
    bce = relu_x - x * tf + sp
    modulator = jnp.exp(gamma * (tf * (-x) - (sp + relu_nx)))
    weighted = modulator * bce * ((1.0 - alpha) + (2.0 * alpha - 1.0) * tf)
    weighted = weighted * valid.astype(jnp.float32)          # broadcast over C
    out_ref[...] += jnp.sum(weighted, axis=0, keepdims=True)


def _box_sum_kernel(bo_ref, bt_ref, out_ref, *, delta):
    """Unnormalized masked-huber sum accumulated into a (1, 1, ts) block."""
    @pl.when(pl.program_id(1) == 0)
    def _init():
        out_ref[...] = jnp.zeros_like(out_ref)

    bo = bo_ref[...].astype(jnp.float32)
    bt = bt_ref[...].astype(jnp.float32)
    err = jnp.abs(bo - bt)
    quad = jnp.minimum(err, delta)
    lin = err - quad
    hub = (0.5 * quad * quad + delta * lin) * (bt != 0.0).astype(jnp.float32)
    out_ref[...] += jnp.sum(hub, axis=0, keepdims=True)[None]


# ---------------------------------------------------------------------------
# per-level pallas_call wrappers
# ---------------------------------------------------------------------------
def _cls_call_packed(idx2d, x2d, num_classes, alpha, gamma, plan):
    S128, ts, n_split, tps = plan
    G = idx2d.shape[0]
    GC = x2d.shape[0]
    kern = functools.partial(_cls_sum_kernel_packed, num_classes=num_classes,
                             num_anchor_rows=G, alpha=alpha, gamma=gamma)
    block_bytes = ts * (GC * x2d.dtype.itemsize + G * 4)
    out = pl.pallas_call(
        kern,
        out_shape=jax.ShapeDtypeStruct((n_split, 1, ts), jnp.float32),
        grid=(n_split, tps),
        in_specs=[
            pl.BlockSpec((G, ts), lambda p, j: (0, p * tps + j)),
            pl.BlockSpec((GC, ts), lambda p, j: (0, p * tps + j)),
        ],
        out_specs=pl.BlockSpec((1, 1, ts), lambda p, j: (p, 0, 0)),
        compiler_params=_compiler_params(_vmem_limit_for(2 * block_bytes)),
        cost_estimate=pl.CostEstimate(
            flops=int(30 * GC * S128),
            transcendentals=int(3 * GC * S128),
            bytes_accessed=int(x2d.nbytes + idx2d.nbytes)),
    )(idx2d, x2d)
    return jnp.sum(out)


def _cls_call_3d(idx3d, x3d, num_classes, alpha, gamma, plan):
    S128, ts, n_split, tps = plan
    G, C = x3d.shape[0], x3d.shape[1]
    kern = functools.partial(_cls_sum_kernel_3d, num_classes=num_classes,
                             alpha=alpha, gamma=gamma)
    block_bytes = ts * (G * _round_up(C, 8) * x3d.dtype.itemsize + G * 8 * 4)
    out = pl.pallas_call(
        kern,
        out_shape=jax.ShapeDtypeStruct((n_split, C, ts), jnp.float32),
        grid=(n_split, tps),
        in_specs=[
            pl.BlockSpec((G, 1, ts), lambda p, j: (0, 0, p * tps + j)),
            pl.BlockSpec((G, C, ts), lambda p, j: (0, 0, p * tps + j)),
        ],
        out_specs=pl.BlockSpec((1, C, ts), lambda p, j: (p, 0, 0)),
        compiler_params=_compiler_params(_vmem_limit_for(2 * block_bytes)),
        cost_estimate=pl.CostEstimate(
            flops=int(30 * G * C * S128),
            transcendentals=int(3 * G * C * S128),
            bytes_accessed=int(x3d.nbytes + idx3d.nbytes)),
    )(idx3d, x3d)
    return jnp.sum(out)


def _box_call(bo2d, bt2d, delta, plan, extra_buffering):
    S128, ts, n_split, tps = plan
    R = bo2d.shape[0]
    kern = functools.partial(_box_sum_kernel, delta=delta)

    def specs():
        if extra_buffering:
            # deeper pipelining on the purely HBM-bound huber input streams
            return [pl.BlockSpec((R, ts), lambda p, j: (0, p * tps + j),
                                 pipeline_mode=pl.Buffered(3)),
                    pl.BlockSpec((R, ts), lambda p, j: (0, p * tps + j),
                                 pipeline_mode=pl.Buffered(3))]
        return [pl.BlockSpec((R, ts), lambda p, j: (0, p * tps + j)),
                pl.BlockSpec((R, ts), lambda p, j: (0, p * tps + j))]

    block_bytes = R * ts * (bo2d.dtype.itemsize + bt2d.dtype.itemsize)
    out = pl.pallas_call(
        kern,
        out_shape=jax.ShapeDtypeStruct((n_split, 1, ts), jnp.float32),
        grid=(n_split, tps),
        in_specs=specs(),
        out_specs=pl.BlockSpec((1, 1, ts), lambda p, j: (p, 0, 0)),
        compiler_params=_compiler_params(_vmem_limit_for(3 * block_bytes)),
        cost_estimate=pl.CostEstimate(
            flops=int(8 * R * S128), transcendentals=0,
            bytes_accessed=int(bo2d.nbytes + bt2d.nbytes)),
    )(bo2d, bt2d)
    return jnp.sum(out)


# ---------------------------------------------------------------------------
# per-level input prep (big tensors: free reshape only; small targets transposed)
# ---------------------------------------------------------------------------
def _prep_cls_level(cls_out, cls_tgt, num_classes, S128):
    B, AC, H, W = cls_out.shape
    A = AC // num_classes
    S = H * W
    # raw NCHW is (B, A, C, H, W) anchor-major/class-minor -> FREE reshape
    x2d = cls_out.reshape(B * A * num_classes, S)
    # small target tensor: (B, H, W, A) -> (B, A, H, W) -> (B*A, S)
    idx2d = jnp.transpose(cls_tgt, (0, 3, 1, 2)).reshape(B * A, S).astype(jnp.int32)
    pad = S128 - S
    if pad:  # only tiny levels (H*W not a 128 multiple) pay a copy here
        x2d = jnp.pad(x2d, ((0, 0), (0, pad)))
        idx2d = jnp.pad(idx2d, ((0, 0), (0, pad)), constant_values=-2)  # ignored
    return idx2d, x2d, B * A


def _prep_box_level(bo, bt, S128):
    B, A4, H, W = bo.shape
    S = H * W
    bo2d = bo.reshape(B * A4, S)                                     # FREE reshape
    bt2d = jnp.transpose(bt, (0, 3, 1, 2)).reshape(B * A4, S)
    pad = S128 - S
    if pad:
        bo2d = jnp.pad(bo2d, ((0, 0), (0, pad)))
        bt2d = jnp.pad(bt2d, ((0, 0), (0, pad)))                     # mask == 0
    return bo2d, bt2d


# ---------------------------------------------------------------------------
# EffdetLoss equivalent (anchor labeling done upstream)
# ---------------------------------------------------------------------------
class EffdetLossPallas:
    """JAX/Pallas equivalent of EffdetLoss.forward."""

    def __init__(self, classification_tasks,
                 alpha=0.25, gamma=1.5, delta=0.1, box_loss_weight=50.0):
        self.alpha = float(alpha)
        self.gamma = float(gamma)
        self.delta = float(delta)
        self.box_loss_weight = float(box_loss_weight)
        self.classification_tasks = dict(classification_tasks)
        self._ncores = _num_tensorcores()
        # guarded fast paths (fallbacks only trigger when tracing eagerly)
        self._packed_ok = True
        self._box_buffered_ok = True
        # kept for parity / reference only -- the kernels never read the table
        self.lookup_tables = {task: make_lookup_table(C)
                              for task, C in self.classification_tasks.items()}

    def _cls_level_sum(self, cls_out, cls_tgt, C):
        B, AC, H, W = cls_out.shape
        A = AC // C
        bytes_per_lane = B * A * C * cls_out.dtype.itemsize + B * A * 4
        plan = _plan_level(H * W, bytes_per_lane, self._ncores)
        idx2d, x2d, G = _prep_cls_level(cls_out, cls_tgt, C, plan[0])
        if C < 8 and self._packed_ok:
            try:
                return _cls_call_packed(idx2d, x2d, C, self.alpha, self.gamma, plan)
            except Exception:
                self._packed_ok = False   # fall back to the padded layout below
        # general path: free reshapes into the (G, C, S) / (G, 1, S) layout
        x3d = x2d.reshape(G, C, plan[0])
        idx3d = idx2d.reshape(G, 1, plan[0])
        return _cls_call_3d(idx3d, x3d, C, self.alpha, self.gamma, plan)

    def _box_level_sum(self, bo, bt):
        B, A4, H, W = bo.shape
        bytes_per_lane = B * A4 * (bo.dtype.itemsize + 4)
        plan = _plan_level(H * W, bytes_per_lane, self._ncores)
        bo2d, bt2d = _prep_box_level(bo, bt, plan[0])
        if self._box_buffered_ok:
            try:
                return _box_call(bo2d, bt2d, self.delta, plan, extra_buffering=True)
            except Exception:
                self._box_buffered_ok = False
        return _box_call(bo2d, bt2d, self.delta, plan, extra_buffering=False)

    def forward(self, y_bboxes, cls_outputs, cls_targets, box_targets, num_positives):
        # ---- box path: computed ONCE (tasks only differ by the npos scalar) ----
        box_huber = jnp.float32(0.0)
        for bo, bt in zip(y_bboxes, box_targets):
            box_huber = box_huber + self._box_level_sum(bo, bt)

        cls_losses = {}
        box_loss = None
        for task, C in self.classification_tasks.items():
            cls_sum = jnp.float32(0.0)
            for co, tg in zip(cls_outputs[task], cls_targets[task]):
                cls_sum = cls_sum + self._cls_level_sum(co, tg, C)
            npos_sum = jnp.sum(num_positives[task]).astype(jnp.float32) + 1.0
            cls_losses[task] = cls_sum / npos_sum
            # matches torch semantics: per-task box loss, the LAST task's is kept
            box_loss = box_huber / (npos_sum * 4.0)

        loss = self.box_loss_weight * box_loss + jnp.mean(
            jnp.stack(list(cls_losses.values())))
        return dict(loss=loss, box_loss=box_loss, **cls_losses)


# ---------------------------------------------------------------------------
# pure-JAX reference (straight port of the torch loss, for correctness check)
# ---------------------------------------------------------------------------
def _ref_level(co, tgt, bo, bt, table, npos_sum, C, alpha, gamma, delta):
    CC = C * C
    idx = tgt.astype(jnp.int32)
    idx_w = jnp.where(idx < 0, idx + CC, idx)
    t = table[idx_w]                                   # (B,H,W,A,C)
    B, H, W, A, _ = t.shape
    t2 = t.reshape(B, H, W, A * C)
    x = co
    bce = jnp.maximum(x, 0.0) - x * t2 + jnp.log1p(jnp.exp(-jnp.abs(x)))
    modulator = jnp.exp(gamma * t2 * (-x) - gamma * jnp.log1p(jnp.exp(-x)))
    loss = modulator * bce
    w = jnp.where(t2 == 1.0, alpha * loss, (1.0 - alpha) * loss) / npos_sum
    w = w.reshape(B, H, W, A, C) * (idx != -2)[..., None]
    cls = jnp.sum(w)
    abs_err = jnp.abs(bo - bt)
    quad = jnp.minimum(abs_err, delta)
    hub = (0.5 * quad * quad + delta * (abs_err - quad)) * (bt != 0.0)
    box = jnp.sum(hub) / (npos_sum * 4.0)
    return cls, box


def _ref_forward(mod, y_bboxes, cls_outputs, cls_targets, box_targets, num_positives):
    cls_losses = {}
    box_loss = None
    for task, C in mod.classification_tasks.items():
        table = mod.lookup_tables[task]
        npos_sum = jnp.sum(num_positives[task]).astype(jnp.float32) + 1.0
        cls_l = jnp.float32(0.0)
        box_l = jnp.float32(0.0)
        for l in range(len(y_bboxes)):
            co = jnp.transpose(cls_outputs[task][l], (0, 2, 3, 1)).astype(jnp.float32)
            bo = jnp.transpose(y_bboxes[l], (0, 2, 3, 1)).astype(jnp.float32)
            c, b = _ref_level(co, cls_targets[task][l], bo, box_targets[l],
                              table, npos_sum, C, mod.alpha, mod.gamma, mod.delta)
            cls_l = cls_l + c
            box_l = box_l + b
        cls_losses[task] = cls_l
        box_loss = box_l
    loss = mod.box_loss_weight * box_loss + jnp.mean(jnp.stack(list(cls_losses.values())))
    return dict(loss=loss, box_loss=box_loss, **cls_losses)


# ---------------------------------------------------------------------------
if __name__ == "__main__":
    key = jax.random.PRNGKey(0)
    B = 2
    A = 9                          # effdet default: 3 scales x 3 aspect ratios
    level_hw = [(16, 8), (8, 8)]   # one exact 128-lane level (no pad) + one padded
    tasks = {"task_a": 4, "task_b": 6, "task_c": 9}  # packed (<8) + general (>=8)

    mod = EffdetLossPallas(tasks)

    keys = iter(jax.random.split(key, 64))
    # bf16 network outputs (halves the dominant HBM read traffic; upcast in-kernel)
    y_bboxes = [(jax.random.normal(next(keys), (B, A * 4, H, W), jnp.float32) * 0.1
                 ).astype(jnp.bfloat16) for H, W in level_hw]
    box_targets = []
    for H, W in level_hw:
        bt = jax.random.normal(next(keys), (B, H, W, A * 4), jnp.float32) * 0.2
        m = jax.random.uniform(next(keys), (B, H, W, A * 4)) < 0.3
        box_targets.append(jnp.where(m, bt, 0.0))

    cls_outputs, cls_targets, num_positives = {}, {}, {}
    for task, C in tasks.items():
        cls_outputs[task] = [jax.random.normal(next(keys), (B, A * C, H, W),
                                               jnp.float32).astype(jnp.bfloat16)
                             for H, W in level_hw]
        cls_targets[task] = [jax.random.randint(next(keys), (B, H, W, A), -2, C * C,
                                                dtype=jnp.int32)
                             for H, W in level_hw]
        num_positives[task] = jax.random.randint(next(keys), (B,), 1, 20,
                                                 dtype=jnp.int32).astype(jnp.float32)

    out = mod.forward(y_bboxes, cls_outputs, cls_targets, box_targets, num_positives)
    out = jax.tree_util.tree_map(jax.block_until_ready, out)

    ref = _ref_forward(mod, y_bboxes, cls_outputs, cls_targets, box_targets, num_positives)
    for k in out:
        np.testing.assert_allclose(np.asarray(out[k]), np.asarray(ref[k]),
                                   rtol=2e-3, atol=1e-3)
    print("KERNEL_OK")
</pallas_src>

<mosaic_0001>
module attributes {stable_mosaic.version = 11 : i64} {
  func.func @_box_sum_kernel(%arg0: i32, %arg1: i32, %arg2: memref<72x128xbf16, #tpu.memory_space<vmem>>, %arg3: memref<72x128xf32, #tpu.memory_space<vmem>>, %arg4: memref<1x1x128xf32, #tpu.memory_space<vmem>>) attributes {dimension_semantics = [#tpu.dimension_semantics<parallel>, #tpu.dimension_semantics<arbitrary>], iteration_bounds = array<i64: 1, 1>, scalar_prefetch = 0 : i64, scratch_operands = 0 : i64, tpu.core_type = #tpu.core_type<tc>, window_params = [{transform_indices = @transform_0, window_bounds = array<i64: 72, 128>}, {transform_indices = @transform_1, window_bounds = array<i64: 72, 128>}, {transform_indices = @transform_2, window_bounds = array<i64: 1, 1, 128>}]} {
    %c0_i32 = arith.constant 0 : i32
    %0 = arith.cmpi eq, %arg1, %c0_i32 : i32
    %1 = arith.extui %0 : i1 to i32
    %c0_i32_0 = arith.constant 0 : i32
    %2 = arith.cmpi ne, %1, %c0_i32_0 : i32
    scf.if %2 {
      %cst_14 = arith.constant 0.000000e+00 : f32
      %28 = vector.broadcast %cst_14 : f32 to vector<1x1x128xf32>
      %c0_15 = arith.constant 0 : index
      %c0_16 = arith.constant 0 : index
      %c0_17 = arith.constant 0 : index
      %29 = vector.load %arg4[%c0_15, %c0_16, %c0_17] : memref<1x1x128xf32, #tpu.memory_space<vmem>>, vector<1x1x128xf32>
      tpu.vector_store %arg4[%c0_15, %c0_16, %c0_17], %28 {strides = array<i32>} : memref<1x1x128xf32, #tpu.memory_space<vmem>>, vector<1x1x128xf32>,
    } else {
    }
    %c0 = arith.constant 0 : index
    %c0_1 = arith.constant 0 : index
    %3 = vector.load %arg2[%c0, %c0_1] : memref<72x128xbf16, #tpu.memory_space<vmem>>, vector<72x128xbf16>
    %4 = arith.extf %3 : vector<72x128xbf16> to vector<72x128xf32>
    %c0_2 = arith.constant 0 : index
    %c0_3 = arith.constant 0 : index
    %5 = vector.load %arg3[%c0_2, %c0_3] : memref<72x128xf32, #tpu.memory_space<vmem>>, vector<72x128xf32>
    %6 = arith.subf %4, %5 : vector<72x128xf32>
    %7 = math.absf %6 : vector<72x128xf32>
    %cst = arith.constant 1.000000e-01 : f32
    %8 = vector.broadcast %cst : f32 to vector<72x128xf32>
    %9 = arith.minimumf %7, %8 : vector<72x128xf32>
    %10 = arith.subf %7, %9 : vector<72x128xf32>
    %cst_4 = arith.constant 5.000000e-01 : f32
    %11 = vector.broadcast %cst_4 : f32 to vector<72x128xf32>
    %12 = arith.mulf %11, %9 : vector<72x128xf32>
    %13 = arith.mulf %12, %9 : vector<72x128xf32>
    %cst_5 = arith.constant 1.000000e-01 : f32
    %14 = vector.broadcast %cst_5 : f32 to vector<72x128xf32>
    %15 = arith.mulf %14, %10 : vector<72x128xf32>
    %16 = arith.addf %13, %15 : vector<72x128xf32>
    %cst_6 = arith.constant 0.000000e+00 : f32
    %17 = vector.broadcast %cst_6 : f32 to vector<72x128xf32>
    %18 = arith.cmpf one, %5, %17 : vector<72x128xf32>
    %19 = arith.extui %18 : vector<72x128xi1> to vector<72x128xi32>
    %20 = arith.sitofp %19 : vector<72x128xi32> to vector<72x128xf32>
    %21 = arith.mulf %16, %20 : vector<72x128xf32>
    %c0_7 = arith.constant 0 : index
    %c0_8 = arith.constant 0 : index
    %c0_9 = arith.constant 0 : index
    %22 = vector.load %arg4[%c0_7, %c0_8, %c0_9] : memref<1x1x128xf32, #tpu.memory_space<vmem>>, vector<1x1x128xf32>
    %cst_10 = arith.constant dense<0.000000e+00> : vector<128xf32>
    %23 = vector.multi_reduction <add>, %21, %cst_10 [0] : vector<72x128xf32> to vector<128xf32>
    %24 = vector.shape_cast %23 : vector<128xf32> to vector<1x128xf32>
    %25 = vector.shape_cast %24 : vector<1x128xf32> to vector<1x1x128xf32>
    %26 = arith.addf %22, %25 : vector<1x1x128xf32>
    %c0_11 = arith.constant 0 : index
    %c0_12 = arith.constant 0 : index
    %c0_13 = arith.constant 0 : index
    %27 = vector.load %arg4[%c0_11, %c0_12, %c0_13] : memref<1x1x128xf32, #tpu.memory_space<vmem>>, vector<1x1x128xf32>
    tpu.vector_store %arg4[%c0_11, %c0_12, %c0_13], %26 {strides = array<i32>} : memref<1x1x128xf32, #tpu.memory_space<vmem>>, vector<1x1x128xf32>,
    return
  }
  func.func @transform_0(%arg0: i32, %arg1: i32) -> (i32, i32) {
    %c1_i32 = arith.constant 1 : i32
    %0 = arith.muli %arg0, %c1_i32 : i32
    %1 = arith.addi %0, %arg1 : i32
    %c0_i32 = arith.constant 0 : i32
    %c0_i32_0 = arith.constant 0 : i32
    return %c0_i32, %1 : i32, i32
  }
  func.func @transform_1(%arg0: i32, %arg1: i32) -> (i32, i32) {
    %c1_i32 = arith.constant 1 : i32
    %0 = arith.muli %arg0, %c1_i32 : i32
    %1 = arith.addi %0, %arg1 : i32
    %c0_i32 = arith.constant 0 : i32
    %c0_i32_0 = arith.constant 0 : i32
    return %c0_i32, %1 : i32, i32
  }
  func.func @transform_2(%arg0: i32, %arg1: i32) -> (i32, i32, i32) {
    %c0_i32 = arith.constant 0 : i32
    %c0_i32_0 = arith.constant 0 : i32
    %c0_i32_1 = arith.constant 0 : i32
    return %arg0, %c0_i32, %c0_i32_0 : i32, i32, i32
  }
}

</mosaic_0001>

<llo_original>
// kernel: tpu_custom_call.1
$region0: #{tpu_custom_call.1}
  #allocation0 [shape = 'u32[]', space=smem, size = 0x4, offset = 0x4, fixed_abs, tag = 'smem constant byte address 0x4 - core index']
  #allocation1 [shape = 'u32[144,128]{1,0:T(1,128)}', space=vmem, size = 0x12000, scoped, tag = 'internal scratch']
  %s0 = inlined_call_operand.hbm [shape: bf16[72,128], index: 0, kind: input, shape index: {}]
  %s1 = inlined_call_operand.hbm [shape: f32[72,128], index: 1, kind: input, shape index: {}]
  %s2 = inlined_call_operand.hbm [shape: f32[1,1,128], index: 2, kind: output, shape index: {}]
  %s3 = sld [smem:[#allocation0]]
  $region30: #{tpu_custom_call.1} parent=0
    _
  %s5 = ssub.s32 1, %s3
  %s6 = scalar_select 0, %s5, %s3
  $region1: #{tpu_custom_call.1} parent=0
    #allocation2 [shape = 'u8[18432]{0}', space=vmem, size = 0x4800, scoped, tag = 'input window, operand 0, single buffered']
    #allocation3 [shape = 's32[1]{0}', space=sflag, size = 0x4, scoped, tag = 'scoped memory for tpu_custom_call.1']
    #allocation4 [shape = 's32[1]{0}', space=sflag, size = 0x4, scoped, tag = 'scoped memory for tpu_custom_call.1']
    #allocation5 [shape = 'u8[36864]{0}', space=vmem, size = 0x9000, scoped, tag = 'input window, operand 1, single buffered']
    #allocation6 [shape = 's32[1]{0}', space=sflag, size = 0x4, scoped, tag = 'scoped memory for tpu_custom_call.1']
    #allocation7 [shape = 'u8[512]{0}', space=vmem, size = 0x400, scoped, tag = 'output window, operand 0, single buffered']
    %7 = vsyncpa [#allocation3], 0
    %8 = vsyncpa [#allocation6], 0
    %9 = vsyncpa [#allocation4], 0
    // Predicated region
    $region2: #{tpu_custom_call.1} parent=1 // pred_check
      _
    $region3: #{tpu_custom_call.1} parent=1 // pred_check_branch
      %11 = sbr.rel (0) target = $region5
    $region4: #{tpu_custom_call.1} parent=1 // pred_region
      %s12 = sadd.s32 0, 0
      %s14 = ssub.s32 576, 576
      %15 = vsyncadd [#allocation3], %s14
      %s16 = smul.addr %s12, 64
      %s17 = scalar_lea.hbm %s0, %s16
      %s18 = sshll.u32 [#allocation2], 4
      %s19 = int_to_ptr.vmem [resolvable:$true] %s18
      %24 = dma.hbm_to_vmem [thread:$0]  %s17, 576, %s19, [#allocation3], 64, 64, 4
    $region5: #{tpu_custom_call.1} parent=1 // pred_fallthru
      _
    // Predicated region
    $region6: #{tpu_custom_call.1} parent=1 // pred_check
      _
    $region7: #{tpu_custom_call.1} parent=1 // pred_check_branch
      %26 = sbr.rel (0) target = $region9
    $region8: #{tpu_custom_call.1} parent=1 // pred_region
      %s27 = sadd.s32 0, 0
      %s29 = ssub.s32 1152, 1152
      %30 = vsyncadd [#allocation6], %s29
      %s31 = smul.addr %s27, 128
      %s32 = scalar_lea.hbm %s1, %s31
      %s33 = sshll.u32 [#allocation5], 4
      %s34 = int_to_ptr.vmem [resolvable:$true] %s33
      %39 = dma.hbm_to_vmem [thread:$0]  %s32, 1152, %s34, [#allocation6], 128, 128, 8
    $region9: #{tpu_custom_call.1} parent=1 // pred_fallthru
      _
    // Predicated region
    $region10: #{tpu_custom_call.1} parent=1 // pred_check
      _
    $region11: #{tpu_custom_call.1} parent=1 // pred_check_branch
      %41 = sbr.rel (0) target = $region13
    $region12: #{tpu_custom_call.1} parent=1 // pred_region
      %42 = dma.done [#allocation3], 576
    $region13: #{tpu_custom_call.1} parent=1 // pred_fallthru
      _
    // Predicated region
    $region14: #{tpu_custom_call.1} parent=1 // pred_check
      _
    $region15: #{tpu_custom_call.1} parent=1 // pred_check_branch
      %44 = sbr.rel (0) target = $region17
    $region16: #{tpu_custom_call.1} parent=1 // pred_region
      %45 = dma.done [#allocation6], 1152
    $region17: #{tpu_custom_call.1} parent=1 // pred_fallthru
      _
    %s46 = sadd.s32 0, 0
    %s47 = sadd.s32 0, 0
    %p48 = scmp.eq.s32.totalorder 0, 0
    // Predicated region
    $region18: #{tpu_custom_call.1} parent=1 // pred_check
      %p49 = pneg %p48
    $region19: #{tpu_custom_call.1} parent=1 // pred_check_branch
      %51 = sbr.rel (%p49) target = $region21
    $region20: #{tpu_custom_call.1} parent=1 // pred_region
      %52 = vst [vmem:[#allocation7] sm:$0x1] 0.0
    $region21: #{tpu_custom_call.1} parent=1 // pred_fallthru
      _
    %v53 = vld [vmem:[#allocation2] sm:$0xf]
    %v54 = vld [vmem:[#allocation2 + $0x4] sm:$0xf]
    %v55 = vld [vmem:[#allocation2 + $0x8] sm:$0xf]
    %v56 = vld [vmem:[#allocation2 + $0xc] sm:$0xf]
    %v57 = vld [vmem:[#allocation2 + $0x10] sm:$0xf]
    %v58 = vld [vmem:[#allocation2 + $0x14] sm:$0xf]
    %v59 = vld [vmem:[#allocation2 + $0x18] sm:$0xf]
    %v60 = vld [vmem:[#allocation2 + $0x1c] sm:$0xf]
    %v61 = vld [vmem:[#allocation2 + $0x20] sm:$0xf]
    %v62 = vunpack.c.l.bf16 %v53
    %v63 = vunpack.c.l.bf16 %v54
    %v64 = vunpack.c.l.bf16 %v55
    %v65 = vunpack.c.l.bf16 %v56
    %v66 = vunpack.c.l.bf16 %v57
    %v67 = vunpack.c.l.bf16 %v58
    %v68 = vunpack.c.l.bf16 %v59
    %v69 = vunpack.c.l.bf16 %v60
    %v70 = vunpack.c.l.bf16 %v61
    %v71 = vld [vmem:[#allocation5] sm:$0xff]
    %v72 = vld [vmem:[#allocation5 + $0x8] sm:$0xff]
    %v73 = vld [vmem:[#allocation5 + $0x10] sm:$0xff]
    %v74 = vld [vmem:[#allocation5 + $0x18] sm:$0xff]
    %v75 = vld [vmem:[#allocation5 + $0x20] sm:$0xff]
    %v76 = vld [vmem:[#allocation5 + $0x28] sm:$0xff]
    %v77 = vld [vmem:[#allocation5 + $0x30] sm:$0xff]
    %v78 = vld [vmem:[#allocation5 + $0x38] sm:$0xff]
    %v79 = vld [vmem:[#allocation5 + $0x40] sm:$0xff]
    %v80 = vsub.f32 %v62, %v71
    %v81 = vsub.f32 %v63, %v72
    %v82 = vsub.f32 %v64, %v73
    %v83 = vsub.f32 %v65, %v74
    %v84 = vsub.f32 %v66, %v75
    %v85 = vsub.f32 %v67, %v76
    %v86 = vsub.f32 %v68, %v77
    %v87 = vsub.f32 %v69, %v78
    %v88 = vsub.f32 %v70, %v79
    %v89 = vand.u32 2147483647, %v80
    %v90 = vand.u32 2147483647, %v81
    %v91 = vand.u32 2147483647, %v82
    %v92 = vand.u32 2147483647, %v83
    %v93 = vand.u32 2147483647, %v84
    %v94 = vand.u32 2147483647, %v85
    %v95 = vand.u32 2147483647, %v86
    %v96 = vand.u32 2147483647, %v87
    %v97 = vand.u32 2147483647, %v88
    %v98 = vmin.f32 %v89, 0.1
    %v99 = vmin.f32 %v90, 0.1
    %v100 = vmin.f32 %v91, 0.1
    %v101 = vmin.f32 %v92, 0.1
    %v102 = vmin.f32 %v93, 0.1
    %v103 = vmin.f32 %v94, 0.1
    %v104 = vmin.f32 %v95, 0.1
    %v105 = vmin.f32 %v96, 0.1
    %v106 = vmin.f32 %v97, 0.1
    %v107 = vsub.f32 %v89, %v98
    %v108 = vsub.f32 %v90, %v99
    %v109 = vsub.f32 %v91, %v100
    %v110 = vsub.f32 %v92, %v101
    %v111 = vsub.f32 %v93, %v102
    %v112 = vsub.f32 %v94, %v103
    %v113 = vsub.f32 %v95, %v104
    %v114 = vsub.f32 %v96, %v105
    %v115 = vsub.f32 %v97, %v106
    %v116 = vmul.f32 %v98, 0.5
    %v117 = vmul.f32 %v99, 0.5
    %v118 = vmul.f32 %v100, 0.5
    %v119 = vmul.f32 %v101, 0.5
    %v120 = vmul.f32 %v102, 0.5
    %v121 = vmul.f32 %v103, 0.5
    %v122 = vmul.f32 %v104, 0.5
    %v123 = vmul.f32 %v105, 0.5
    %v124 = vmul.f32 %v106, 0.5
    %v125 = vmul.f32 %v116, %v98
    %v126 = vmul.f32 %v117, %v99
    %v127 = vmul.f32 %v118, %v100
    %v128 = vmul.f32 %v119, %v101
    %v129 = vmul.f32 %v120, %v102
    %v130 = vmul.f32 %v121, %v103
    %v131 = vmul.f32 %v122, %v104
    %v132 = vmul.f32 %v123, %v105
    %v133 = vmul.f32 %v124, %v106
    %v134 = vmul.f32 %v107, 0.1
    %v135 = vmul.f32 %v108, 0.1
    %v136 = vmul.f32 %v109, 0.1
    %v137 = vmul.f32 %v110, 0.1
    %v138 = vmul.f32 %v111, 0.1
    %v139 = vmul.f32 %v112, 0.1
    %v140 = vmul.f32 %v113, 0.1
    %v141 = vmul.f32 %v114, 0.1
    %v142 = vmul.f32 %v115, 0.1
    %v143 = vadd.f32 %v125, %v134
    %v144 = vadd.f32 %v126, %v135
    %v145 = vadd.f32 %v127, %v136
    %v146 = vadd.f32 %v128, %v137
    %v147 = vadd.f32 %v129, %v138
    %v148 = vadd.f32 %v130, %v139
    %v149 = vadd.f32 %v131, %v140
    %v150 = vadd.f32 %v132, %v141
    %v151 = vadd.f32 %v133, %v142
    %vm152 = vcmp.ne.f32.partialorder %v71, 0.0
    %vm153 = vcmp.ne.f32.partialorder %v72, 0.0
    %vm154 = vcmp.ne.f32.partialorder %v73, 0.0
    %vm155 = vcmp.ne.f32.partialorder %v74, 0.0
    %vm156 = vcmp.ne.f32.partialorder %v75, 0.0
    %vm157 = vcmp.ne.f32.partialorder %v76, 0.0
    %vm158 = vcmp.ne.f32.partialorder %v77, 0.0
    %vm159 = vcmp.ne.f32.partialorder %v78, 0.0
    %vm160 = vcmp.ne.f32.partialorder %v79, 0.0
    %v161 = vsel %vm152, 1, 0
    %v162 = vsel %vm153, 1, 0
    %v163 = vsel %vm154, 1, 0
    %v164 = vsel %vm155, 1, 0
    %v165 = vsel %vm156, 1, 0
    %v166 = vsel %vm157, 1, 0
    %v167 = vsel %vm158, 1, 0
    %v168 = vsel %vm159, 1, 0
    %v169 = vsel %vm160, 1, 0
    %v170 = vcvt.s32.f32 %v161
    %v171 = vcvt.s32.f32 %v162
    %v172 = vcvt.s32.f32 %v163
    %v173 = vcvt.s32.f32 %v164
    %v174 = vcvt.s32.f32 %v165
    %v175 = vcvt.s32.f32 %v166
    %v176 = vcvt.s32.f32 %v167
    %v177 = vcvt.s32.f32 %v168
    %v178 = vcvt.s32.f32 %v169
    %v179 = vmul.f32 %v143, %v170
    %v180 = vmul.f32 %v144, %v171
    %v181 = vmul.f32 %v145, %v172
    %v182 = vmul.f32 %v146, %v173
    %v183 = vmul.f32 %v147, %v174
    %v184 = vmul.f32 %v148, %v175
    %v185 = vmul.f32 %v149, %v176
    %v186 = vmul.f32 %v150, %v177
    %v187 = vmul.f32 %v151, %v178
    %v188 = vld [vmem:[#allocation7] sm:$0x1]
    %v189 = vadd.f32 %v179, %v180
    %v190 = vadd.f32 %v189, %v181
    %v191 = vadd.f32 %v190, %v182
    %v192 = vadd.f32 %v191, %v183
    %v193 = vadd.f32 %v192, %v184
    %v194 = vadd.f32 %v193, %v185
    %v195 = vadd.f32 %v194, %v186
    %v196 = vadd.f32 %v195, %v187
    %v197 = vrot.slane %v196, 4
    %v198 = vadd.f32 %v196, %v197
    %v199 = vrot.slane %v198, 2
    %v200 = vadd.f32 %v198, %v199
    %v201 = vrot.slane %v200, 1
    %v202 = vadd.f32 %v200, %v201
    %v203 = vadd.f32 %v188, %v202
    %204 = vst [vmem:[#allocation7] sm:$0x1] %v203
    // Predicated region
    $region22: #{tpu_custom_call.1} parent=1 // pred_check
      _
    $region23: #{tpu_custom_call.1} parent=1 // pred_check_branch
      %206 = sbr.rel (0) target = $region25
    $region24: #{tpu_custom_call.1} parent=1 // pred_region
      %s208 = ssub.s32 16, 16
      %209 = vsyncadd [#allocation4], %s208
      %s211 = sshll.u32 [#allocation7], 4
      %s212 = int_to_ptr.vmem [resolvable:$true] %s211
      %214 = dma.vmem_to_hbm [thread:$0]  %s212, 16, %s2, [#allocation4]
    $region25: #{tpu_custom_call.1} parent=1 // pred_fallthru
      _
    // Predicated region
    $region26: #{tpu_custom_call.1} parent=1 // pred_check
      _
    $region27: #{tpu_custom_call.1} parent=1 // pred_check_branch
      %216 = sbr.rel (0) target = $region29
    $region28: #{tpu_custom_call.1} parent=1 // pred_region
      %217 = dma.done [#allocation4], 16
    $region29: #{tpu_custom_call.1} parent=1 // pred_fallthru
      _
    %218 = vsyncpa [#allocation3], 1
    %219 = vsyncpa [#allocation6], 1
    %220 = vsyncpa [#allocation4], 1

</llo_original>
